<compile_context>
chip_gen: v5e
topology: v5e:2x2
jax: 0.10.0
libtpu: 0.0.40
codegen_flags: <defaults>
</compile_context>

<pallas_src>
import math
import functools

import jax
import jax.numpy as jnp
from jax.experimental import pallas as pl
from jax.experimental.pallas import tpu as pltpu


def _splitmix32(x):
    """Stateless 32-bit mixer (splitmix32 / murmur3-fmix style). uint32 in/out."""
    x = x + jnp.uint32(0x9E3779B9)
    x = (x ^ (x >> 16)) * jnp.uint32(0x85EBCA6B)
    x = (x ^ (x >> 13)) * jnp.uint32(0xC2B2AE35)
    x = x ^ (x >> 16)
    return x


def _pe_dropout_kernel(seed_ref, x_ref, pe_ref, o_ref, *, p, seq_tile):
    # x_ref : (TS, B, D) or (TS, B*D) tile of the input (seq tile leading).
    # pe_ref: (TS, 1, D) / (TS, B*D) / (TS, D) tile of the PE buffer; it
    #         broadcasts against x under normal jnp broadcasting rules.
    y = x_ref[...].astype(jnp.float32) + pe_ref[...].astype(jnp.float32)

    if p >= 1.0:                                   # degenerate config: drop all
        y = jnp.zeros_like(y)
    elif p > 0.0:
        # Seeded inverted dropout (torch.nn.Dropout training semantics):
        # keep w.p. (1-p), scale kept values by 1/(1-p).
        # Randomness = splitmix32 hash of the *global* element index xor'd with
        # a pre-mixed seed: no pltpu PRNG state, no per-tile reseed cost, and
        # the seq grid axis stays embarrassingly parallel.
        # TODO(synk): random stream is not bit-identical to torch's RNG.
        shape = y.shape
        lin = (jax.lax.broadcasted_iota(jnp.int32, shape, 0)
               + pl.program_id(0) * seq_tile)
        for ax in range(1, len(shape)):
            lin = lin * shape[ax] + jax.lax.broadcasted_iota(jnp.int32, shape, ax)
        bits = _splitmix32(lin.astype(jnp.uint32) ^ seed_ref[0].astype(jnp.uint32))
        thresh = jnp.uint32(min(int(round(p * 2.0 ** 32)), 2 ** 32 - 1))
        keep = (bits >= thresh).astype(jnp.float32)          # P(keep) = 1 - p
        y = y * (keep * jnp.float32(1.0 / (1.0 - p)))        # mask-multiply

    o_ref[...] = y.astype(o_ref.dtype)


def build_pe_buffer(max_len, d_model, dtype=jnp.float32):
    """Same buffer the torch module registers: shape (max_len, 1, d_model)."""
    position = jnp.arange(max_len, dtype=jnp.float32)[:, None]
    div_term = jnp.exp(
        jnp.arange(0, d_model, 2, dtype=jnp.float32) * (-math.log(10000.0) / d_model)
    )
    pe = jnp.zeros((max_len, d_model), dtype=jnp.float32)
    pe = pe.at[:, 0::2].set(jnp.sin(position * div_term))
    pe = pe.at[:, 1::2].set(jnp.cos(position * div_term))
    return pe[:, None, :].astype(dtype)                     # (max_len, 1, d_model)


def _choose_seq_tile(seq_len, row_bytes):
    # ~2 MiB of x per tile: amortizes the ~0.35 us per-grid-step overhead and
    # streams large DMAs, while the double-buffered working set (x + out + pe,
    # 2 buffers each) stays far below the v7x 64 MiB VMEM budget.
    target_bytes = 2 << 20
    ts = max(8, target_bytes // max(int(row_bytes), 1))
    if ts >= seq_len:
        return seq_len                       # one block covers the whole array
    return max(8, (ts // 8) * 8)             # keep sublane (8) divisibility


def positional_encoding_forward(x, pe, seed=0, *, p=0.1, training=True):
    """x: (S, B, D).  pe: (max_len, 1, D) buffer.  Returns dropout(x + pe[:S])."""
    S, B, D = x.shape
    p_eff = float(p) if training else 0.0
    itemsize = jnp.dtype(x.dtype).itemsize

    # Pre-mixed seed (decorrelates nearby integer seeds across calls); SMEM.
    seed_arr = _splitmix32(jnp.asarray([seed], dtype=jnp.uint32)).astype(jnp.int32)

    aligned = (B % 8 == 0) and (D % 128 == 0)
    if aligned:
        # Production shapes: 3-D blocks, pe broadcast over batch *inside* the
        # kernel (pe HBM read stays 1/B of x); full pe buffer, no slice copy.
        x_in, pe_in = x, pe
        x_spec = lambda ts: pl.BlockSpec((ts, B, D), lambda s, seed_ref: (s, 0, 0))
        pe_spec = lambda ts: pl.BlockSpec((ts, 1, D), lambda s, seed_ref: (s, 0, 0))
        out_struct = jax.ShapeDtypeStruct((S, B, D), x.dtype)
    else:
        # Small / unaligned d_model (e.g. D=32): fold batch into lanes so the
        # output tile is lane-dense (avoids narrow masked stores) and seq sits
        # on sublanes.  pe is broadcast over batch in the wrapper (cheap here).
        x_in = x.reshape(S, B * D)
        if B == 1:
            pe_in = pe.reshape(pe.shape[0], D)              # free view, full buffer
        else:
            pe_in = jnp.broadcast_to(pe[:S], (S, B, D)).reshape(S, B * D)
        W, Wp = x_in.shape[1], pe_in.shape[1]
        x_spec = lambda ts: pl.BlockSpec((ts, W), lambda s, seed_ref: (s, 0))
        pe_spec = lambda ts: pl.BlockSpec((ts, Wp), lambda s, seed_ref: (s, 0))
        out_struct = jax.ShapeDtypeStruct((S, W), x.dtype)

    ts = _choose_seq_tile(S, B * D * itemsize)
    kernel = functools.partial(_pe_dropout_kernel, p=p_eff, seq_tile=ts)

    out = pl.pallas_call(
        kernel,
        out_shape=out_struct,
        grid_spec=pltpu.PrefetchScalarGridSpec(
            num_scalar_prefetch=1,                 # seed lands in SMEM
            grid=(pl.cdiv(S, ts),),                # coarse seq tiles
            in_specs=[x_spec(ts), pe_spec(ts)],
            out_specs=x_spec(ts),
        ),
        compiler_params=pltpu.CompilerParams(
            # No cross-step state -> parallel (v7x megacore can split the grid).
            dimension_semantics=("parallel",),
            # Explicit budget; << 64 MiB physical VMEM on v7x, raises v5e default.
            vmem_limit_bytes=32 * 1024 * 1024,
        ),
    )(seed_arr, x_in, pe_in)

    return out if aligned else out.reshape(S, B, D)


if __name__ == "__main__":
    P_DROP = 0.3  # matches the module-level `dropout = 0.3` in the reference

    key = jax.random.PRNGKey(0)
    k1, k2 = jax.random.split(key)

    # ---- Folded path (small d_model: D=32, B=2) ----------------------------
    S, B, D = 8, 2, 32
    MAX_LEN = 64
    x = jax.random.normal(k1, (S, B, D), dtype=jnp.float32)
    pe = build_pe_buffer(MAX_LEN, D)
    ref = x + pe[:S]

    out_eval = jax.block_until_ready(
        positional_encoding_forward(x, pe, seed=0, p=P_DROP, training=False))
    assert out_eval.shape == (S, B, D)
    assert jnp.allclose(out_eval, ref, atol=1e-6), "eval-mode mismatch (folded path)"

    out_train = jax.block_until_ready(
        positional_encoding_forward(x, pe, seed=1234, p=P_DROP, training=True))
    scaled = ref / (1.0 - P_DROP)
    ok = jnp.isclose(out_train, scaled, atol=1e-5) | jnp.isclose(out_train, 0.0)
    assert bool(jnp.all(ok)), "training-mode dropout values inconsistent (folded path)"
    drop_frac = float(jnp.mean((out_train == 0.0).astype(jnp.float32)))
    assert 0.1 < drop_frac < 0.5, f"dropout rate looks wrong: {drop_frac}"

    # ---- Aligned path (B % 8 == 0, D % 128 == 0): 3-D blocks ---------------
    S2, B2, D2 = 16, 8, 128
    x2 = jax.random.normal(k2, (S2, B2, D2), dtype=jnp.float32)
    pe2 = build_pe_buffer(32, D2)
    ref2 = x2 + pe2[:S2]

    out2_eval = jax.block_until_ready(
        positional_encoding_forward(x2, pe2, seed=0, p=P_DROP, training=False))
    assert jnp.allclose(out2_eval, ref2, atol=1e-6), "eval-mode mismatch (aligned path)"

    out2_train = jax.block_until_ready(
        positional_encoding_forward(x2, pe2, seed=7, p=P_DROP, training=True))
    scaled2 = ref2 / (1.0 - P_DROP)
    ok2 = jnp.isclose(out2_train, scaled2, atol=1e-5) | jnp.isclose(out2_train, 0.0)
    assert bool(jnp.all(ok2)), "training-mode dropout values inconsistent (aligned path)"

    print("KERNEL_OK")
</pallas_src>

<mosaic_0001>
module attributes {stable_mosaic.version = 11 : i64} {
  func.func @_pe_dropout_kernel(%arg0: i32, %arg1: memref<1xi32, #tpu.memory_space<smem>>, %arg2: memref<8x64xf32, #tpu.memory_space<vmem>>, %arg3: memref<8x64xf32, #tpu.memory_space<vmem>>, %arg4: memref<8x64xf32, #tpu.memory_space<vmem>>) attributes {dimension_semantics = [#tpu.dimension_semantics<parallel>], iteration_bounds = array<i64: 1>, scalar_prefetch = 1 : i64, scratch_operands = 0 : i64, tpu.core_type = #tpu.core_type<tc>, window_params = [{transform_indices = @transform_0, window_bounds = array<i64: 8, 64>}, {transform_indices = @transform_1, window_bounds = array<i64: 8, 64>}, {transform_indices = @transform_2, window_bounds = array<i64: 8, 64>}]} {
    %c0 = arith.constant 0 : index
    %c0_0 = arith.constant 0 : index
    %0 = vector.load %arg2[%c0, %c0_0] : memref<8x64xf32, #tpu.memory_space<vmem>>, vector<8x64xf32>
    %c0_1 = arith.constant 0 : index
    %c0_2 = arith.constant 0 : index
    %1 = vector.load %arg3[%c0_1, %c0_2] : memref<8x64xf32, #tpu.memory_space<vmem>>, vector<8x64xf32>
    %2 = arith.addf %0, %1 : vector<8x64xf32>
    %c0_3 = arith.constant 0 : index
    %c0_4 = arith.constant 0 : index
    %3 = vector.load %arg4[%c0_3, %c0_4] : memref<8x64xf32, #tpu.memory_space<vmem>>, vector<8x64xf32>
    tpu.vector_store %arg4[%c0_3, %c0_4], %2 {strides = array<i32>} : memref<8x64xf32, #tpu.memory_space<vmem>>, vector<8x64xf32>,
    return
  }
  func.func @transform_0(%arg0: i32, %arg1: memref<1xi32, #tpu.memory_space<smem>>) -> (i32, i32) {
    %c0_i32 = arith.constant 0 : i32
    %c0_i32_0 = arith.constant 0 : i32
    return %arg0, %c0_i32 : i32, i32
  }
  func.func @transform_1(%arg0: i32, %arg1: memref<1xi32, #tpu.memory_space<smem>>) -> (i32, i32) {
    %c0_i32 = arith.constant 0 : i32
    %c0_i32_0 = arith.constant 0 : i32
    return %arg0, %c0_i32 : i32, i32
  }
  func.func @transform_2(%arg0: i32, %arg1: memref<1xi32, #tpu.memory_space<smem>>) -> (i32, i32) {
    %c0_i32 = arith.constant 0 : i32
    %c0_i32_0 = arith.constant 0 : i32
    return %arg0, %c0_i32 : i32, i32
  }
}

</mosaic_0001>

<llo_original>
// kernel: tpu_custom_call.1
$region0: #{tpu_custom_call.1}
  #allocation0 [shape = 'u32[]', space=smem, size = 0x4, offset = 0x4, fixed_abs, tag = 'smem constant byte address 0x4 - core index']
  #allocation1 [shape = 'u32[72,128]{1,0:T(1,128)}', space=vmem, size = 0x9000, scoped, tag = 'internal scratch']
  #allocation2 [shape = 's32[1]{0}', space=sflag, size = 0x4, scoped, tag = 'scoped memory for tpu_custom_call.1']
  #allocation3 [shape = 's32[1]{0:T(128)S(6)}', space=smem, size = 0x200, scoped, tag = 'prefetched SMEM operand 0']
  %s0 = inlined_call_operand.<no memory space> [shape: s32[1], index: 0, kind: input, shape index: {}]
  %s1 = inlined_call_operand.hbm [shape: f32[8,64], index: 1, kind: input, shape index: {}]
  %s2 = inlined_call_operand.hbm [shape: f32[8,64], index: 2, kind: input, shape index: {}]
  %s3 = inlined_call_operand.hbm [shape: f32[8,64], index: 3, kind: output, shape index: {}]
  %s4 = sld [smem:[#allocation0]]
  $region26: #{tpu_custom_call.1} parent=0
    _
  %s6 = ssub.s32 1, %s4
  %s7 = scalar_select 0, %s6, %s4
  %8 = sst [smem:[#allocation3]] %s0
  $region1: #{tpu_custom_call.1} parent=0
    #allocation4 [shape = 'u8[4096]{0}', space=vmem, size = 0x1000, scoped, tag = 'input window, operand 1, single buffered']
    #allocation5 [shape = 's32[1]{0}', space=sflag, size = 0x4, scoped, tag = 'scoped memory for tpu_custom_call.1']
    #allocation6 [shape = 's32[1]{0}', space=sflag, size = 0x4, scoped, tag = 'scoped memory for tpu_custom_call.1']
    #allocation7 [shape = 'u8[4096]{0}', space=vmem, size = 0x1000, scoped, tag = 'input window, operand 2, single buffered']
    #allocation8 [shape = 's32[1]{0}', space=sflag, size = 0x4, scoped, tag = 'scoped memory for tpu_custom_call.1']
    #allocation9 [shape = 'u8[4096]{0}', space=vmem, size = 0x1000, scoped, tag = 'output window, operand 0, single buffered']
    %9 = vsyncpa [#allocation5], 0
    %10 = vsyncpa [#allocation8], 0
    %11 = vsyncpa [#allocation6], 0
    // Predicated region
    $region2: #{tpu_custom_call.1} parent=1 // pred_check
      _
    $region3: #{tpu_custom_call.1} parent=1 // pred_check_branch
      %13 = sbr.rel (0) target = $region5
    $region4: #{tpu_custom_call.1} parent=1 // pred_region
      %15 = vsyncadd [#allocation5], 0
      %s17 = sshll.u32 %s1, 4
      %s18 = int_to_ptr.hbm [resolvable:$true] %s17
      %s19 = sshll.u32 [#allocation4], 4
      %s20 = int_to_ptr.vmem [resolvable:$true] %s19
      %22 = dma.hbm_to_vmem [thread:$0]  %s18, 128, %s20, [#allocation5]
    $region5: #{tpu_custom_call.1} parent=1 // pred_fallthru
      _
    // Predicated region
    $region6: #{tpu_custom_call.1} parent=1 // pred_check
      _
    $region7: #{tpu_custom_call.1} parent=1 // pred_check_branch
      %24 = sbr.rel (0) target = $region9
    $region8: #{tpu_custom_call.1} parent=1 // pred_region
      %26 = vsyncadd [#allocation8], 0
      %s28 = sshll.u32 %s2, 4
      %s29 = int_to_ptr.hbm [resolvable:$true] %s28
      %s30 = sshll.u32 [#allocation7], 4
      %s31 = int_to_ptr.vmem [resolvable:$true] %s30
      %33 = dma.hbm_to_vmem [thread:$0]  %s29, 128, %s31, [#allocation8]
    $region9: #{tpu_custom_call.1} parent=1 // pred_fallthru
      _
    // Predicated region
    $region10: #{tpu_custom_call.1} parent=1 // pred_check
      _
    $region11: #{tpu_custom_call.1} parent=1 // pred_check_branch
      %35 = sbr.rel (0) target = $region13
    $region12: #{tpu_custom_call.1} parent=1 // pred_region
      %37 = dma.done [#allocation5], 128
    $region13: #{tpu_custom_call.1} parent=1 // pred_fallthru
      _
    // Predicated region
    $region14: #{tpu_custom_call.1} parent=1 // pred_check
      _
    $region15: #{tpu_custom_call.1} parent=1 // pred_check_branch
      %39 = sbr.rel (0) target = $region17
    $region16: #{tpu_custom_call.1} parent=1 // pred_region
      %41 = dma.done [#allocation8], 128
    $region17: #{tpu_custom_call.1} parent=1 // pred_fallthru
      _
    %v42 = vld [vmem:[#allocation4] sm:$0xff]
    %v43 = vld [vmem:[#allocation7] sm:$0xff]
    %v44 = vadd.f32 %v42, %v43
    %vm45 = vcmask 523264
    %46 = vst.msk [vmem:[#allocation9] sm:$0xff] %vm45, %v44
    // Predicated region
    $region18: #{tpu_custom_call.1} parent=1 // pred_check
      _
    $region19: #{tpu_custom_call.1} parent=1 // pred_check_branch
      %48 = sbr.rel (0) target = $region21
    $region20: #{tpu_custom_call.1} parent=1 // pred_region
      %50 = vsyncadd [#allocation6], 0
      %s52 = sshll.u32 [#allocation9], 4
      %s53 = int_to_ptr.vmem [resolvable:$true] %s52
      %s54 = sshll.u32 %s3, 4
      %s55 = int_to_ptr.hbm [resolvable:$true] %s54
      %57 = dma.vmem_to_hbm [thread:$0]  %s53, 128, %s55, [#allocation6]
    $region21: #{tpu_custom_call.1} parent=1 // pred_fallthru
      _
    // Predicated region
    $region22: #{tpu_custom_call.1} parent=1 // pred_check
      _
    $region23: #{tpu_custom_call.1} parent=1 // pred_check_branch
      %59 = sbr.rel (0) target = $region25
    $region24: #{tpu_custom_call.1} parent=1 // pred_region
      %61 = dma.done [#allocation6], 128
    $region25: #{tpu_custom_call.1} parent=1 // pred_fallthru
      _
    %62 = vsyncpa [#allocation5], 1
    %63 = vsyncpa [#allocation8], 1
    %64 = vsyncpa [#allocation6], 1

</llo_original>
